<compile_context>
chip_gen: v7x
topology: tpu7x:2x2x1
jax: 0.10.0
libtpu: 0.0.40
codegen_flags: <defaults>
</compile_context>

<pallas_src>
import math

import jax
import jax.numpy as jnp
from jax.experimental import pallas as pl
from jax.experimental.pallas import tpu as pltpu

_LANE = 128
_SUBLANE = 8


def _round_up(x: int, m: int) -> int:
    return -(-x // m) * m


def _round_down(x: int, m: int) -> int:
    return (x // m) * m


def _vmem_capacity_bytes() -> int:
    """Generation-aware VMEM size; conservative (v7x-sized) fallback."""
    try:
        cap = getattr(pltpu.get_tpu_info(), "vmem_capacity_bytes", None)
        if cap:
            return int(cap)
    except Exception:
        pass
    return 64 << 20


def _linear_kernel_body(x_ref, wb_ref, o_ref):
    # x_ref: (TN, 1), wb_ref: (2, M) [row 0 = W, row 1 = b], o_ref: (TN, M)
    # out[n, m] = x[n, 0] * W[m] + b[m]  -- pure VPU broadcast FMA.
    wb = wb_ref[...]
    o_ref[...] = x_ref[...] * wb[0:1, :] + wb[1:2, :]
    # TODO(synk): dropout with p > 0 (training mode) not implemented; module default is p=0.


def linear_kernel_forward(x, weight, bias, in_channels, out_channels, tile_rows=None):
    """x: (*, 1).  weight: (M, 1) (nn.Linear layout).  bias: (M,).

    Returns (*, in_channels, out_channels).
    """
    lead = x.shape[:-1]
    assert x.shape[-1] == 1, "LinearKernel expects input of shape (*, 1)"
    M = in_channels * out_channels
    N = math.prod(lead) if lead else 1

    if N == 0:  # zero-size leading dim: nothing to compute
        return jnp.zeros((*lead, in_channels, out_channels), x.dtype)

    itemsize = jnp.dtype(x.dtype).itemsize
    x2 = x.reshape(N, 1)
    # Fuse W and b into one resident (2, M) block -> single extra DMA stream.
    wb = jnp.concatenate([weight.reshape(1, M), bias.reshape(1, M)], axis=0)

    # ---- VMEM accounting (lane-padded tile footprints) ----------------------
    M_lanes = _round_up(M, _LANE)                      # out tile pads lanes to 128
    wb_vmem = 2 * _SUBLANE * M_lanes * itemsize        # (2,M)->(8,M_lanes), 2 buffers
    cap = _vmem_capacity_bytes()

    if tile_rows is None:
        budget = max(int(0.70 * cap) - wb_vmem - (4 << 20), 4 << 20)
        # Per-row bytes of the double-buffered (out + x) tiles; the (TN, 1) x
        # tile pads its lane dim to 128.
        per_row = 2 * itemsize * (M_lanes + _LANE)
        t_budget = max(_round_down(budget // per_row, _SUBLANE), _SUBLANE)
        # Target >= ~8 grid steps (both v7x TensorCores get work, pipeline depth)
        t_steps = _round_up(pl.cdiv(N, 8), _SUBLANE)
        # ...but keep output tiles >= ~2 MiB so per-step overhead stays tiny.
        t_min = _round_up(max((2 << 20) // (itemsize * M_lanes), _SUBLANE), _SUBLANE)
        tile_rows = min(t_budget, max(t_steps, t_min))
    tile_rows = max(_SUBLANE, _round_up(min(int(tile_rows), N), _SUBLANE))

    grid = (pl.cdiv(N, tile_rows),)  # ragged final block handled by Pallas

    need = 2 * tile_rows * itemsize * (M_lanes + _LANE) + wb_vmem
    vmem_limit = max(min(int(need + (4 << 20)), int(0.92 * cap)), 16 << 20)

    out = pl.pallas_call(
        _linear_kernel_body,
        out_shape=jax.ShapeDtypeStruct((N, M), x.dtype),
        grid=grid,
        in_specs=[
            pl.BlockSpec((tile_rows, 1), lambda i: (i, 0)),  # x: stream row tiles
            pl.BlockSpec((2, M), lambda i: (0, 0)),          # fused W/b: resident
        ],
        out_specs=pl.BlockSpec((tile_rows, M), lambda i: (i, 0)),
        compiler_params=pltpu.CompilerParams(
            dimension_semantics=("parallel",),
            vmem_limit_bytes=int(vmem_limit),
        ),
        cost_estimate=pl.CostEstimate(
            flops=2 * N * M,
            transcendentals=0,
            bytes_accessed=itemsize * (N * M + N + 2 * M),
        ),
    )(x2, wb)

    return out.reshape(*lead, in_channels, out_channels)


def _reference(x, weight, bias, in_channels, out_channels):
    lead = x.shape[:-1]
    y = x.reshape(-1, 1) @ weight.T + bias
    return y.reshape(*lead, in_channels, out_channels)


if __name__ == "__main__":
    key = jax.random.PRNGKey(0)
    kx, kw, kb, kx2, kw2, kb2 = jax.random.split(key, 6)

    # Primary example: batch=2, seq=8, in_channels=4, out_channels=32 -> M=128.
    in_channels, out_channels = 4, 32
    M = in_channels * out_channels
    x = jax.random.normal(kx, (2, 8, 1), dtype=jnp.float32)
    # nn.Linear(1, M) init: U(-1/sqrt(in_features), 1/sqrt(in_features)) = U(-1, 1)
    weight = jax.random.uniform(kw, (M, 1), dtype=jnp.float32, minval=-1.0, maxval=1.0)
    bias = jax.random.uniform(kb, (M,), dtype=jnp.float32, minval=-1.0, maxval=1.0)

    y = jax.block_until_ready(linear_kernel_forward(x, weight, bias, in_channels, out_channels))
    ref = _reference(x, weight, bias, in_channels, out_channels)
    assert y.shape == (2, 8, in_channels, out_channels)
    assert jnp.allclose(y, ref, atol=1e-5, rtol=1e-5), "mismatch vs reference (M=128 case)"

    # Secondary check: M not a multiple of 128 (exact-width, unpadded output block)
    # and N not a multiple of 8 (ragged edge block, masked stores).
    in2, out2 = 4, 16  # M = 64
    M2 = in2 * out2
    x_b = jax.random.normal(kx2, (3, 7, 1), dtype=jnp.float32)
    w_b = jax.random.uniform(kw2, (M2, 1), dtype=jnp.float32, minval=-1.0, maxval=1.0)
    b_b = jax.random.uniform(kb2, (M2,), dtype=jnp.float32, minval=-1.0, maxval=1.0)
    y_b = jax.block_until_ready(linear_kernel_forward(x_b, w_b, b_b, in2, out2))
    ref_b = _reference(x_b, w_b, b_b, in2, out2)
    assert y_b.shape == (3, 7, in2, out2)
    assert jnp.allclose(y_b, ref_b, atol=1e-5, rtol=1e-5), "mismatch vs reference (M=64 case)"

    # Third check: force a small tile so the grid has multiple steps with a
    # ragged final block (N=21, tile_rows=8 -> grid=3, last block 5 rows).
    y_c = jax.block_until_ready(
        linear_kernel_forward(x_b, w_b, b_b, in2, out2, tile_rows=8))
    assert jnp.allclose(y_c, ref_b, atol=1e-5, rtol=1e-5), "mismatch vs reference (ragged grid)"

    print("KERNEL_OK")
</pallas_src>

<mosaic_0001>
module attributes {stable_mosaic.version = 11 : i64} {
  func.func @_linear_kernel_body(%arg0: i32, %arg1: memref<16x1xf32, #tpu.memory_space<vmem>>, %arg2: memref<2x128xf32, #tpu.memory_space<vmem>>, %arg3: memref<16x128xf32, #tpu.memory_space<vmem>>) attributes {dimension_semantics = [#tpu.dimension_semantics<parallel>], iteration_bounds = array<i64: 1>, scalar_prefetch = 0 : i64, scratch_operands = 0 : i64, tpu.core_type = #tpu.core_type<tc>, window_params = [{transform_indices = @transform_0, window_bounds = array<i64: 16, 1>}, {pipeline_mode = #tpu.pipeline_mode<synchronous>, transform_indices = @transform_1, window_bounds = array<i64: 2, 128>}, {transform_indices = @transform_2, window_bounds = array<i64: 16, 128>}]} {
    %c0 = arith.constant 0 : index
    %c0_0 = arith.constant 0 : index
    %0 = vector.load %arg2[%c0, %c0_0] : memref<2x128xf32, #tpu.memory_space<vmem>>, vector<2x128xf32>
    %c0_1 = arith.constant 0 : index
    %c0_2 = arith.constant 0 : index
    %1 = vector.load %arg1[%c0_1, %c0_2] : memref<16x1xf32, #tpu.memory_space<vmem>>, vector<16x1xf32>
    %2 = vector.extract_strided_slice %0 {offsets = [0, 0], sizes = [1, 128], strides = [1, 1]} : vector<2x128xf32> to vector<1x128xf32>
    %3 = vector.broadcast %1 : vector<16x1xf32> to vector<16x128xf32>
    %4 = vector.broadcast %2 : vector<1x128xf32> to vector<16x128xf32>
    %5 = arith.mulf %3, %4 : vector<16x128xf32>
    %6 = vector.extract_strided_slice %0 {offsets = [1, 0], sizes = [1, 128], strides = [1, 1]} : vector<2x128xf32> to vector<1x128xf32>
    %7 = vector.broadcast %6 : vector<1x128xf32> to vector<16x128xf32>
    %8 = arith.addf %5, %7 : vector<16x128xf32>
    %c0_3 = arith.constant 0 : index
    %c0_4 = arith.constant 0 : index
    %9 = vector.load %arg3[%c0_3, %c0_4] : memref<16x128xf32, #tpu.memory_space<vmem>>, vector<16x128xf32>
    tpu.vector_store %arg3[%c0_3, %c0_4], %8 {strides = array<i32>} : memref<16x128xf32, #tpu.memory_space<vmem>>, vector<16x128xf32>,
    return
  }
  func.func @transform_0(%arg0: i32) -> (i32, i32) {
    %c0_i32 = arith.constant 0 : i32
    %c0_i32_0 = arith.constant 0 : i32
    return %arg0, %c0_i32 : i32, i32
  }
  func.func @transform_1(%arg0: i32) -> (i32, i32) {
    %c0_i32 = arith.constant 0 : i32
    %c0_i32_0 = arith.constant 0 : i32
    %c0_i32_1 = arith.constant 0 : i32
    return %c0_i32, %c0_i32_0 : i32, i32
  }
  func.func @transform_2(%arg0: i32) -> (i32, i32) {
    %c0_i32 = arith.constant 0 : i32
    %c0_i32_0 = arith.constant 0 : i32
    return %arg0, %c0_i32 : i32, i32
  }
}

</mosaic_0001>

<llo_original>
// kernel: tpu_custom_call.1
$region0: #{tpu_custom_call.1}
  #allocation0 [shape = 'u32[]', space=smem, size = 0x4, offset = 0x4, fixed_abs, tag = 'smem constant byte address 0x4 - core index']
  #allocation1 [shape = 'u32[144,128]{1,0:T(1,128)}', space=vmem, size = 0x12000, scoped, tag = 'internal scratch']
  %s0 = inlined_call_operand.vmem [shape: f32[16,1], index: 0, kind: input, shape index: {}]
  %s1 = inlined_call_operand.vmem [shape: f32[2,128], index: 1, kind: input, shape index: {}]
  %s2 = inlined_call_operand.hbm [shape: f32[16,128], index: 2, kind: output, shape index: {}]
  %s3 = sld [smem:[#allocation0]]
  $region18: #{tpu_custom_call.1} parent=0
    _
  %s5 = ssub.s32 1, %s3
  %s6 = scalar_select 0, %s5, %s3
  $region1: #{tpu_custom_call.1} parent=0
    #allocation2 [shape = 'u8[8192]{0}', space=vmem, size = 0x2000, scoped, tag = 'output window, operand 0, single buffered']
    #allocation3 [shape = 's32[1]{0}', space=sflag, size = 0x4, scoped, tag = 'scoped memory for tpu_custom_call.1']
    %7 = vsyncpa [#allocation3], 0
    // Predicated region
    $region2: #{tpu_custom_call.1} parent=1 // pred_check
      _
    $region3: #{tpu_custom_call.1} parent=1 // pred_check_branch
      %9 = sbr.rel (0) target = $region5
    $region4: #{tpu_custom_call.1} parent=1 // pred_region
      _
    $region5: #{tpu_custom_call.1} parent=1 // pred_fallthru
      _
    // Predicated region
    $region6: #{tpu_custom_call.1} parent=1 // pred_check
      _
    $region7: #{tpu_custom_call.1} parent=1 // pred_check_branch
      %11 = sbr.rel (0) target = $region9
    $region8: #{tpu_custom_call.1} parent=1 // pred_region
      _
    $region9: #{tpu_custom_call.1} parent=1 // pred_fallthru
      _
    %v12 = vld [vmem:[%s1] sm:$0x3]
    %v13 = vld [vmem:[%s0] sm:$0xff]
    %v14 = vld [vmem:[%s0 + $0x8] sm:$0xff]
    %16 = vset.pattern.permute.xlu0 0
    %17 = vperm.xlu0 %16, %v13
    %v18 = vpop.permute.xlu0 %17
    %21 = vset.pattern.permute.xlu0 0
    %22 = vperm.xlu0 %21, %v14
    %v23 = vpop.permute.xlu0 %22
    %v25 = vlaneseq
    %v26 = vshrl.u32 %v25, 7
    %v27 = vsub.s32 0, %v26
    %v28 = vrot.slane %v12, %v27
    %v29 = vmul.f32 %v18, %v28
    %v30 = vmul.f32 %v23, %v28
    %v31 = vlaneseq
    %v32 = vshrl.u32 %v31, 7
    %v33 = vsub.s32 1, %v32
    %v34 = vrot.slane %v12, %v33
    %v35 = vadd.f32 %v29, %v34
    %v36 = vadd.f32 %v30, %v34
    %37 = vst [vmem:[#allocation2] sm:$0xff] %v35
    %38 = vst [vmem:[#allocation2 + $0x8] sm:$0xff] %v36
    // Predicated region
    $region10: #{tpu_custom_call.1} parent=1 // pred_check
      _
    $region11: #{tpu_custom_call.1} parent=1 // pred_check_branch
      %40 = sbr.rel (0) target = $region13
    $region12: #{tpu_custom_call.1} parent=1 // pred_region
      %s42 = ssub.s32 256, 256
      %43 = vsyncadd [#allocation3], %s42
      %s44 = sshll.u32 [#allocation2], 4
      %s45 = int_to_ptr.vmem [resolvable:$true] %s44
      %50 = dma.vmem_to_hbm [thread:$0]  %s45, 256, %s2, [#allocation3], 128, 128, 8
    $region13: #{tpu_custom_call.1} parent=1 // pred_fallthru
      _
    // Predicated region
    $region14: #{tpu_custom_call.1} parent=1 // pred_check
      _
    $region15: #{tpu_custom_call.1} parent=1 // pred_check_branch
      %52 = sbr.rel (0) target = $region17
    $region16: #{tpu_custom_call.1} parent=1 // pred_region
      %53 = dma.done [#allocation3], 256
    $region17: #{tpu_custom_call.1} parent=1 // pred_fallthru
      _
    %54 = vsyncpa [#allocation3], 1

</llo_original>
